<compile_context>
chip_gen: v7x
topology: tpu7x:2x2x1
jax: 0.10.0
libtpu: 0.0.40
codegen_flags: <defaults>
</compile_context>

<pallas_src>
import math
from functools import partial

import jax
import jax.numpy as jnp
from jax import lax
from jax.experimental import pallas as pl
from jax.experimental.pallas import tpu as pltpu

# Module constants (fixed by the PyTorch CNN.__init__).
IN_CHANNELS = 60
OUT_CHANNELS = 100
KERNEL_SIZES = (3, 5, 7)
MAX_K = max(KERNEL_SIZES)
HALO = MAX_K // 2                               # 3
NUM_TAPS = 2 * HALO + 1                         # 7
K_IM2COL = NUM_TAPS * IN_CHANNELS               # 420 (MXU contraction depth)
C_TOTAL = OUT_CHANNELS * len(KERNEL_SIZES)      # 300
C_PAD = 384                                     # 3*128 -> lane-dense output stores

_INV_SQRT2 = 1.0 / math.sqrt(2.0)


def _gelu_f32(x):
    # Exact erf-form GELU (matches the PyTorch module's GELU), evaluated in f32.
    return x * 0.5 * (1.0 + lax.erf(x * _INV_SQRT2))


def _cnn_fused_kernel(x_ref, w_ref, y_ref, xp_ref, *, bblk, seq_len):
    # x_ref : (Bblk, L, 420)    im2col'd input rows (bf16), tap-major lanes
    # w_ref : (420, C_PAD)      packed weights of all 3 convs (bf16), VMEM-resident
    # y_ref : (Bblk, L, C_PAD)  post-GELU activations
    # xp_ref: (Bblk, 1, C_PAD)  per-row global max-pool over the sequence
    xm = x_ref[...].reshape(bblk * seq_len, K_IM2COL)
    # Single K=420 MXU matmul, bf16 operands, f32 accumulation.
    acc = jnp.dot(xm, w_ref[...], preferred_element_type=jnp.float32)
    y = _gelu_f32(acc).reshape(bblk, seq_len, C_PAD)          # fused GELU epilogue (f32)
    y_ref[...] = y.astype(y_ref.dtype)
    xp_ref[...] = jnp.max(y, axis=1, keepdims=True).astype(xp_ref.dtype)


def pack_conv_weights(conv_weights, matmul_dtype=jnp.bfloat16):
    """One-time repack: 3 x [Cout, Cin, k]  ->  (NUM_TAPS*Cin, C_PAD) matmul RHS.

    Hoisted out of the forward pass; built with transpose/pad/concat/reshape
    (no chained .at[].set), pre-cast to the MXU operand dtype.
    """
    taps = []
    for k, w in zip(KERNEL_SIZES, conv_weights):
        pad = HALO - k // 2
        wt = jnp.transpose(w, (2, 1, 0))                      # (k, Cin, Cout)
        taps.append(jnp.pad(wt, ((pad, pad), (0, 0), (0, 0))))  # (NUM_TAPS, Cin, Cout)
    w_all = jnp.concatenate(taps, axis=-1)                    # (NUM_TAPS, Cin, 3*Cout)
    w_all = jnp.pad(w_all, ((0, 0), (0, 0), (0, C_PAD - C_TOTAL)))
    return w_all.reshape(K_IM2COL, C_PAD).astype(matmul_dtype)


def _pick_batch_block(batch):
    # Keep >=2 grid steps (>=4 when batch allows) so dimension_semantics
    # ("parallel",) can still shard across v7x's two TensorCores; cap Bblk at 8.
    if batch <= 3:
        return 1
    bblk = min(8, max(1, batch // 4))
    while batch % bblk:
        bblk -= 1
    return bblk


def cnn_forward(x, w_packed, *, mask=None, matmul_dtype=jnp.bfloat16):
    """Forward pass of the CNN module (inference semantics).

    x        : [B, L, IN_CHANNELS]
    w_packed : (NUM_TAPS*IN_CHANNELS, C_PAD) from pack_conv_weights (precomputed once)
    Returns (y, xp):  y [B, L, 3*OUT_CHANNELS],  xp [B, 3*OUT_CHANNELS]
    """
    if mask is not None:
        # TODO(synk): optional mask / masked_fill path not implemented (tested path uses mask=None).
        raise NotImplementedError("mask is not supported in the Pallas kernel")

    B, L, cin = x.shape
    assert cin == IN_CHANNELS
    assert w_packed.shape == (K_IM2COL, C_PAD)
    out_dtype = x.dtype
    bblk = _pick_batch_block(B)

    # Halo pad (the convs' "same" zero padding) + im2col along the sequence
    # axis, done once in the wrapper (x is tiny: B*L*420 elements), cast to the
    # MXU operand dtype.  This removes per-tap matmuls / shifted slices from
    # the kernel entirely.
    x_pad = jnp.pad(x, ((0, 0), (HALO, HALO), (0, 0)))
    x_cols = jnp.concatenate(
        [x_pad[:, d:d + L, :] for d in range(NUM_TAPS)], axis=-1
    ).astype(matmul_dtype)                                    # (B, L, 420)

    kernel = partial(_cnn_fused_kernel, bblk=bblk, seq_len=L)
    # TODO(synk): if L grows large in production, additionally tile the sequence
    # axis with halo'd blocks instead of holding a (Bblk*L, C_PAD) f32 accumulator.
    y_pad, xp_pad = pl.pallas_call(
        kernel,
        out_shape=(
            jax.ShapeDtypeStruct((B, L, C_PAD), out_dtype),
            jax.ShapeDtypeStruct((B, 1, C_PAD), out_dtype),
        ),
        grid_spec=pltpu.PrefetchScalarGridSpec(
            num_scalar_prefetch=0,
            grid=(B // bblk,),
            in_specs=[
                pl.BlockSpec((bblk, L, K_IM2COL), lambda b: (b, 0, 0)),
                # Constant block index -> packed weights are fetched once and stay
                # resident in VMEM across all grid steps.  (Single-buffering the
                # spec would shave the second ~158 KiB buffer, but VMEM is nowhere
                # near a constraint at these shapes.)
                pl.BlockSpec((K_IM2COL, C_PAD), lambda b: (0, 0)),
            ],
            out_specs=(
                pl.BlockSpec((bblk, L, C_PAD), lambda b: (b, 0, 0)),
                pl.BlockSpec((bblk, 1, C_PAD), lambda b: (b, 0, 0)),
            ),
        ),
        compiler_params=pltpu.CompilerParams(
            dimension_semantics=("parallel",),
        ),
    )(x_cols, w_packed)

    # Drop the zero-padded lanes (C_PAD -> 300).
    y = y_pad[:, :, :C_TOTAL]
    xp = xp_pad[:, 0, :C_TOTAL]
    # Dropout(p=0.3): identity in inference.
    # TODO(synk): training-mode (stochastic) dropout not implemented.
    return y, xp


def cnn_ref(x, conv_weights):
    """Pure-JAX reference of the same forward pass (f32, exact-erf GELU)."""
    xt = jnp.transpose(x, (0, 2, 1)).astype(jnp.float32)       # [B, Cin, L]
    outs = []
    for k, w in zip(KERNEL_SIZES, conv_weights):
        y = lax.conv_general_dilated(
            xt, w.astype(jnp.float32),
            window_strides=(1,), padding=[(k // 2, k // 2)],
            dimension_numbers=("NCH", "OIH", "NCH"),
            precision=lax.Precision.HIGHEST)
        outs.append(_gelu_f32(y))
    cat = jnp.concatenate(outs, axis=1)                         # [B, 3*Cout, L]
    xp = jnp.max(cat, axis=-1)                                  # [B, 3*Cout]
    y_out = jnp.transpose(cat, (0, 2, 1))                       # [B, L, 3*Cout]
    return y_out.astype(x.dtype), xp.astype(x.dtype)


if __name__ == "__main__":
    key = jax.random.PRNGKey(0)
    kx, k3, k5, k7 = jax.random.split(key, 4)
    B, L = 2, 16

    def q(k, shape, scale):
        # Values exactly representable in bf16 so the bf16 MXU operands and the
        # f32 XLA reference conv agree to well within the tolerance.
        return (jnp.round(jax.random.normal(k, shape) * 8.0) / 8.0) * scale

    x = q(kx, (B, L, IN_CHANNELS), 1.0).astype(jnp.float32)
    weights = [
        q(kw, (OUT_CHANNELS, IN_CHANNELS, kk), 0.125).astype(jnp.float32)
        for kw, kk in zip((k3, k5, k7), KERNEL_SIZES)
    ]

    # One-time weight repack (hoisted out of the forward call path).
    w_packed = pack_conv_weights(weights)

    fwd = jax.jit(cnn_forward)
    y, xp = fwd(x, w_packed)
    y = jax.block_until_ready(y)
    xp = jax.block_until_ready(xp)

    y_ref, xp_ref = cnn_ref(x, weights)

    assert y.shape == (B, L, C_TOTAL) and xp.shape == (B, C_TOTAL)
    assert y.dtype == x.dtype and xp.dtype == x.dtype
    assert jnp.allclose(y, y_ref, atol=1e-3, rtol=1e-3), float(jnp.max(jnp.abs(y - y_ref)))
    assert jnp.allclose(xp, xp_ref, atol=1e-3, rtol=1e-3), float(jnp.max(jnp.abs(xp - xp_ref)))

    print("KERNEL_OK")
</pallas_src>

<mosaic_0001>
module attributes {stable_mosaic.version = 11 : i64} {
  func.func @_cnn_fused_kernel(%arg0: i32, %arg1: memref<1x16x420xbf16, #tpu.memory_space<vmem>>, %arg2: memref<420x384xbf16, #tpu.memory_space<vmem>>, %arg3: memref<1x16x384xf32, #tpu.memory_space<vmem>>, %arg4: memref<1x1x384xf32, #tpu.memory_space<vmem>>) attributes {dimension_semantics = [#tpu.dimension_semantics<parallel>], iteration_bounds = array<i64: 2>, scalar_prefetch = 0 : i64, scratch_operands = 0 : i64, tpu.core_type = #tpu.core_type<tc>, window_params = [{transform_indices = @transform_0, window_bounds = array<i64: 1, 16, 420>}, {pipeline_mode = #tpu.pipeline_mode<synchronous>, transform_indices = @transform_1, window_bounds = array<i64: 420, 384>}, {transform_indices = @transform_2, window_bounds = array<i64: 1, 16, 384>}, {transform_indices = @transform_3, window_bounds = array<i64: 1, 1, 384>}]} {
    %c0 = arith.constant 0 : index
    %c0_0 = arith.constant 0 : index
    %c0_1 = arith.constant 0 : index
    %0 = vector.load %arg1[%c0, %c0_0, %c0_1] : memref<1x16x420xbf16, #tpu.memory_space<vmem>>, vector<1x16x420xbf16>
    %1 = vector.shape_cast %0 : vector<1x16x420xbf16> to vector<16x420xbf16>
    %c0_2 = arith.constant 0 : index
    %c0_3 = arith.constant 0 : index
    %2 = vector.load %arg2[%c0_2, %c0_3] : memref<420x384xbf16, #tpu.memory_space<vmem>>, vector<420x384xbf16>
    %cst = arith.constant dense<0.000000e+00> : vector<16x384xf32>
    %3 = tpu.matmul %1, %2, %cst {dimension_numbers = #tpu.dot_dimension_numbers<[1], [0], [0], [1], [0, 0, 1, 1], [], []>} : vector<16x420xbf16>, vector<420x384xbf16>, vector<16x384xf32> -> vector<16x384xf32>
    %cst_4 = arith.constant 5.000000e-01 : f32
    %4 = vector.broadcast %cst_4 : f32 to vector<16x384xf32>
    %5 = arith.mulf %3, %4 : vector<16x384xf32>
    %cst_5 = arith.constant 0.707106769 : f32
    %6 = vector.broadcast %cst_5 : f32 to vector<16x384xf32>
    %7 = arith.mulf %3, %6 : vector<16x384xf32>
    %8 = math.erf %7 : vector<16x384xf32>
    %cst_6 = arith.constant 1.000000e+00 : f32
    %9 = vector.broadcast %cst_6 : f32 to vector<16x384xf32>
    %10 = arith.addf %9, %8 : vector<16x384xf32>
    %11 = arith.mulf %5, %10 : vector<16x384xf32>
    %12 = vector.shape_cast %11 : vector<16x384xf32> to vector<1x16x384xf32>
    %c0_7 = arith.constant 0 : index
    %c0_8 = arith.constant 0 : index
    %c0_9 = arith.constant 0 : index
    %13 = vector.load %arg3[%c0_7, %c0_8, %c0_9] : memref<1x16x384xf32, #tpu.memory_space<vmem>>, vector<1x16x384xf32>
    tpu.vector_store %arg3[%c0_7, %c0_8, %c0_9], %12 {strides = array<i32>} : memref<1x16x384xf32, #tpu.memory_space<vmem>>, vector<1x16x384xf32>,
    %cst_10 = arith.constant dense<0xFF800000> : vector<1x384xf32>
    %14 = vector.multi_reduction <maximumf>, %12, %cst_10 [1] : vector<1x16x384xf32> to vector<1x384xf32>
    %15 = vector.shape_cast %14 : vector<1x384xf32> to vector<1x1x384xf32>
    %c0_11 = arith.constant 0 : index
    %c0_12 = arith.constant 0 : index
    %c0_13 = arith.constant 0 : index
    %16 = vector.load %arg4[%c0_11, %c0_12, %c0_13] : memref<1x1x384xf32, #tpu.memory_space<vmem>>, vector<1x1x384xf32>
    tpu.vector_store %arg4[%c0_11, %c0_12, %c0_13], %15 {strides = array<i32>} : memref<1x1x384xf32, #tpu.memory_space<vmem>>, vector<1x1x384xf32>,
    return
  }
  func.func @transform_0(%arg0: i32) -> (i32, i32, i32) {
    %c0_i32 = arith.constant 0 : i32
    %c0_i32_0 = arith.constant 0 : i32
    %c0_i32_1 = arith.constant 0 : i32
    return %arg0, %c0_i32, %c0_i32_0 : i32, i32, i32
  }
  func.func @transform_1(%arg0: i32) -> (i32, i32) {
    %c0_i32 = arith.constant 0 : i32
    %c0_i32_0 = arith.constant 0 : i32
    %c0_i32_1 = arith.constant 0 : i32
    return %c0_i32, %c0_i32_0 : i32, i32
  }
  func.func @transform_2(%arg0: i32) -> (i32, i32, i32) {
    %c0_i32 = arith.constant 0 : i32
    %c0_i32_0 = arith.constant 0 : i32
    %c0_i32_1 = arith.constant 0 : i32
    return %arg0, %c0_i32, %c0_i32_0 : i32, i32, i32
  }
  func.func @transform_3(%arg0: i32) -> (i32, i32, i32) {
    %c0_i32 = arith.constant 0 : i32
    %c0_i32_0 = arith.constant 0 : i32
    %c0_i32_1 = arith.constant 0 : i32
    return %arg0, %c0_i32, %c0_i32_0 : i32, i32, i32
  }
}

</mosaic_0001>

<llo_original>
// kernel: cnn_forward.1
$region0: #{cnn_forward.1}
  #allocation0 [shape = 'u32[]', space=smem, size = 0x4, offset = 0x4, fixed_abs, tag = 'smem constant byte address 0x4 - core index']
  #allocation1 [shape = 'u32[144,128]{1,0:T(1,128)}', space=vmem, size = 0x12000, scoped, tag = 'internal scratch']
  %s0 = inlined_call_operand.vmem [shape: bf16[2,16,420], index: 0, kind: input, shape index: {}]
  %s1 = inlined_call_operand.hbm [shape: bf16[420,384], index: 1, kind: input, shape index: {}]
  %s2 = inlined_call_operand.hbm [shape: f32[2,16,384], index: 2, kind: output, shape index: {0}]
  %s3 = inlined_call_operand.vmem [shape: f32[2,1,384], index: 3, kind: output, shape index: {1}]
  %4 = xla_tuple %s2, %s3
  %s5 = sld [smem:[#allocation0]]
  $region53: #{cnn_forward.1} parent=0
    _
  %s7 = ssub.s32 1, %s5
  %s8 = scalar_select 0, %s7, %s5
  $region1: #{cnn_forward.1} parent=0
    #allocation2 [shape = 'u8[325632]{0}', space=vmem, size = 0x4f800, scoped, tag = 'input window, operand 1, single buffered']
    #allocation3 [shape = 's32[2]{0}', space=sflag, size = 0x8, scoped, tag = 'scoped memory for cnn_forward.1']
    #allocation4 [shape = 's32[2]{0}', space=sflag, size = 0x8, scoped, tag = 'scoped memory for cnn_forward.1']
    #allocation5 [shape = 'u8[49152]{0}', space=vmem, size = 0xc000, scoped, tag = 'output window, operand 0']
    %9 = vsyncpa [#allocation3], 0
    %10 = vsyncpa [#allocation4], 0
    %s11 = scalar_lea.sflag [#allocation4], 1
    %12 = vsyncpa %s11, 0
    loop: start=0, step=1, limit=4
    $region2: #{cnn_forward.1} parent=1 // loop_pre_header
      _
    $region3: #{cnn_forward.1} parent=1 // loop_header
      %s14 = sphi 0, %s18
      %p15 = scmp.ge.s32.totalorder %s14, 4
      %s24 = sphi 0, %s26
      %s27 = sphi 0, %s24
      %s28 = sphi 0, %s27
      %s44 = sphi 0, %s28
      %s48 = sphi 0, %s48
      %s50 = sphi 0, %s48
      %s51 = sphi 0, %s50
      %s65 = sphi 0, %s51
      %s71 = sphi 0, %s73
      %s74 = sphi 0, %s71
      %s75 = sphi 0, %s74
      %s91 = sphi 0, %s75
      %s97 = sphi 0, %s99
      %s100 = sphi 0, %s97
      %s101 = sphi 0, %s100
      %s117 = sphi 0, %s101
    $region4: #{cnn_forward.1} parent=1 // loop_header_branch
      %17 = sbr.rel (%p15) target = $region8
    $region5: #{cnn_forward.1} parent=1 // loop_body
      %s19 = ssub.s32 %s14, 1
      %s20 = ssub.s32 %s14, 2
      %s21 = sadd.s32 %s14, 1
      %s22 = ssub.s32 %s14, %s21
      %p23 = scmp.eq.s32.totalorder %s22, 0
      %s25 = sadd.s32 %s24, 1
      %s26 = scalar_select %p23, %s24, %s25
      %p29 = pneg %p23
      %p30 = scmp.eq.s32.totalorder %s14, 1
      %p31 = por %p29, %p30
      %p32 = scmp.ne.s32.totalorder %s24, %s27
      %p33 = scmp.eq.s32.totalorder %s14, 0
      %p34 = por %p32, %p33
      %p35 = scmp.ne.s32.totalorder %s24, %s27
      %p36 = scmp.eq.s32.totalorder %s19, 1
      %p37 = por %p35, %p36
      %p38 = scmp.ne.s32.totalorder %s27, %s28
      %p39 = scmp.eq.s32.totalorder %s19, 0
      %p40 = por %p38, %p39
      %p41 = scmp.ne.s32.totalorder %s27, %s28
      %p42 = scmp.eq.s32.totalorder %s20, 1
      %p43 = por %p41, %p42
      %p45 = scmp.ne.s32.totalorder %s28, %s44
      %p46 = scmp.eq.s32.totalorder %s20, 0
      %p47 = por %p45, %p46
      %s49 = sadd.s32 %s48, 1
      %p52 = scmp.eq.s32.totalorder %s14, 1
      %p53 = scmp.ne.s32.totalorder %s48, %s50
      %p54 = scmp.eq.s32.totalorder %s14, 0
      %p55 = por %p53, %p54
      %p56 = scmp.ne.s32.totalorder %s48, %s50
      %p57 = scmp.eq.s32.totalorder %s19, 1
      %p58 = por %p56, %p57
      %p59 = scmp.ne.s32.totalorder %s50, %s51
      %p60 = scmp.eq.s32.totalorder %s19, 0
      %p61 = por %p59, %p60
      %p62 = scmp.ne.s32.totalorder %s50, %s51
      %p63 = scmp.eq.s32.totalorder %s20, 1
      %p64 = por %p62, %p63
      %p66 = scmp.ne.s32.totalorder %s51, %s65
      %p67 = scmp.eq.s32.totalorder %s20, 0
      %p68 = por %p66, %p67
      %s69 = ssub.s32 %s14, %s21
      %p70 = scmp.eq.s32.totalorder %s69, 0
      %s72 = sadd.s32 %s71, 1
      %s73 = scalar_select %p70, %s71, %s72
      %p76 = pneg %p70
      %p77 = scmp.eq.s32.totalorder %s14, 1
      %p78 = por %p76, %p77
      %p79 = scmp.ne.s32.totalorder %s71, %s74
      %p80 = scmp.eq.s32.totalorder %s14, 0
      %p81 = por %p79, %p80
      %p82 = scmp.ne.s32.totalorder %s71, %s74
      %p83 = scmp.eq.s32.totalorder %s19, 1
      %p84 = por %p82, %p83
      %p85 = scmp.ne.s32.totalorder %s74, %s75
      %p86 = scmp.eq.s32.totalorder %s19, 0
      %p87 = por %p85, %p86
      %p88 = scmp.ne.s32.totalorder %s74, %s75
      %p89 = scmp.eq.s32.totalorder %s20, 1
      %p90 = por %p88, %p89
      %p92 = scmp.ne.s32.totalorder %s75, %s91
      %p93 = scmp.eq.s32.totalorder %s20, 0
      %p94 = por %p92, %p93
      %s95 = ssub.s32 %s14, %s21
      %p96 = scmp.eq.s32.totalorder %s95, 0
      %s98 = sadd.s32 %s97, 1
      %s99 = scalar_select %p96, %s97, %s98
      %p102 = pneg %p96
      %p103 = scmp.eq.s32.totalorder %s14, 1
      %p104 = por %p102, %p103
      %p105 = scmp.ne.s32.totalorder %s97, %s100
      %p106 = scmp.eq.s32.totalorder %s14, 0
      %p107 = por %p105, %p106
      %p108 = scmp.ne.s32.totalorder %s97, %s100
      %p109 = scmp.eq.s32.totalorder %s19, 1
      %p110 = por %p108, %p109
      %p111 = scmp.ne.s32.totalorder %s100, %s101
      %p112 = scmp.eq.s32.totalorder %s19, 0
      %p113 = por %p111, %p112
      %p114 = scmp.ne.s32.totalorder %s100, %s101
      %p115 = scmp.eq.s32.totalorder %s20, 1
      %p116 = por %p114, %p115
      %p118 = scmp.ne.s32.totalorder %s101, %s117
      %p119 = scmp.eq.s32.totalorder %s20, 0
      %p120 = por %p118, %p119
      %p121 = scmp.le.s32.totalorder 1, %s14
      %p122 = scmp.lt.s32.totalorder %s14, 3
      %p123 = pnand %p121, %p122
      %p124 = pneg %p123
      // Predicated region
      $region9: #{cnn_forward.1} parent=5 // pred_check
        _
      $region10: #{cnn_forward.1} parent=5 // pred_check_branch
        %126 = sbr.rel (%p123) target = $region12
      $region11: #{cnn_forward.1} parent=5 // pred_region
        %s127 = ssub.s32 %s14, 1
        // Predicated region
        $region13: #{cnn_forward.1} parent=11 // pred_check
          %p128 = pneg %p61
        $region14: #{cnn_forward.1} parent=11 // pred_check_branch
          %130 = sbr.rel (%p128) target = $region16
        $region15: #{cnn_forward.1} parent=11 // pred_region
          %s132 = ssub.s32 10176, 10176
          %133 = vsyncadd [#allocation3], %s132
          %s134 = sshll.u32 [#allocation2], 4
          %s135 = int_to_ptr.vmem [resolvable:$true] %s134
          %140 = dma.hbm_to_vmem [thread:$0]  %s1, 10176, %s135, [#allocation3], 192, 192, 12
        $region16: #{cnn_forward.1} parent=11 // pred_fallthru
          _
      $region12: #{cnn_forward.1} parent=5 // pred_fallthru
        _
      %p141 = scmp.lt.s32.totalorder %s14, 2
      // Predicated region
      $region17: #{cnn_forward.1} parent=5 // pred_check
        %p142 = pneg %p141
      $region18: #{cnn_forward.1} parent=5 // pred_check_branch
        %144 = sbr.rel (%p142) target = $region20
      $region19: #{cnn_forward.1} parent=5 // pred_region
        // Predicated region
        $region21: #{cnn_forward.1} parent=19 // pred_check
          %p145 = pneg %p34
        $region22: #{cnn_forward.1} parent=19 // pred_check_branch
          %147 = sbr.rel (%p145) target = $region24
        $region23: #{cnn_forward.1} parent=19 // pred_region
          %p148 = scmp.lt.s32.totalorder %s14, 1
          %s149 = scalar_select %p148, %s14, 1
          %s150 = smul.addr %s149, 8
          %s151 = smul.addr %s150, 4
          %s152 = scalar_lea.vmem %s0, %s151
        $region24: #{cnn_forward.1} parent=19 // pred_fallthru
          _
      $region20: #{cnn_forward.1} parent=5 // pred_fallthru
        _
      %p153 = scmp.le.s32.totalorder 1, %s14
      %p154 = scmp.lt.s32.totalorder %s14, 3
      %p155 = pnand %p153, %p154
      %p156 = pneg %p155
      // Predicated region
      $region25: #{cnn_forward.1} parent=5 // pred_check
        _
      $region26: #{cnn_forward.1} parent=5 // pred_check_branch
        %158 = sbr.rel (%p155) target = $region28
      $region27: #{cnn_forward.1} parent=5 // pred_region
        %s159 = ssub.s32 %s14, 1
        // Predicated region
        $region29: #{cnn_forward.1} parent=27 // pred_check
          %p160 = pneg %p61
        $region30: #{cnn_forward.1} parent=27 // pred_check_branch
          %162 = sbr.rel (%p160) target = $region32
        $region31: #{cnn_forward.1} parent=27 // pred_region
          %163 = dma.done [#allocation3], 10176
        $region32: #{cnn_forward.1} parent=27 // pred_fallthru
          _
        %p164 = scmp.lt.s32.totalorder %s19, 1
        %s165 = scalar_select %p164, %s19, 1
        %s166 = smul.addr %s165, 8
        %s167 = smul.addr %s166, 4
        %s168 = scalar_lea.vmem %s0, %s167
        %p169 = pneg %p40
        %p170 = pneg %p37
        %p171 = pneg %p61
        %p172 = pneg %p58
        %p173 = pneg %p87
        %p174 = pneg %p84
        %s175 = sand.u32 %s74, 1
        %s176 = scalar_lea.sflag [#allocation4], %s175
        %s177 = sand.u32 %s74, 1
        %s178 = smul.addr %s177, 48
        %s179 = scalar_lea.vmem [#allocation5], %s178
        %p180 = pneg %p113
        %p181 = pneg %p110
        %p182 = scmp.lt.s32.totalorder %s19, 1
        %s183 = scalar_select %p182, %s19, 1
        %s184 = smul.addr %s183, 3
        %s185 = scalar_lea.vmem %s3, %s184
        %p186 = scmp.lt.s32.totalorder %s19, 1
        %s187 = scalar_select %p186, %s19, 1
        %s188 = smul.addr %s187, 8
        %s189 = smul.addr %s188, 4
        %s190 = scalar_lea.vmem %s0, %s189
        %p191 = scmp.lt.s32.totalorder %s19, 1
        %s192 = scalar_select %p191, %s19, 1
        %s193 = smul.addr %s192, 3
        %s194 = scalar_lea.vmem %s3, %s193
        %v196 = vld [vmem:[%s190] sm:$0xff]
        %v197 = vld [vmem:[%s190 + $0x8] sm:$0xff]
        %v198 = vld [vmem:[%s190 + $0x10] sm:$0xff]
        %v199 = vld [vmem:[%s190 + $0x18] sm:$0xff]
        %v200 = vld [vmem:[#allocation2] sm:$0xff]
        %v201 = vld [vmem:[#allocation2 + $0x8] sm:$0xf]
        %v202 = vld [vmem:[#allocation2 + $0xc] sm:$0xff]
        %v203 = vld [vmem:[#allocation2 + $0x14] sm:$0xf]
        %v204 = vld [vmem:[#allocation2 + $0x18] sm:$0xff]
        %v205 = vld [vmem:[#allocation2 + $0x20] sm:$0xf]
        %v206 = vld [vmem:[#allocation2 + $0x24] sm:$0xff]
        %v207 = vld [vmem:[#allocation2 + $0x2c] sm:$0xf]
        %v208 = vld [vmem:[#allocation2 + $0x30] sm:$0xff]
        %v209 = vld [vmem:[#allocation2 + $0x38] sm:$0xf]
        %v210 = vld [vmem:[#allocation2 + $0x3c] sm:$0xff]
        %v211 = vld [vmem:[#allocation2 + $0x44] sm:$0xf]
        %v212 = vld [vmem:[#allocation2 + $0x48] sm:$0xff]
        %v213 = vld [vmem:[#allocation2 + $0x50] sm:$0xf]
        %v214 = vld [vmem:[#allocation2 + $0x54] sm:$0xff]
        %v215 = vld [vmem:[#allocation2 + $0x5c] sm:$0xf]
        %v216 = vld [vmem:[#allocation2 + $0x60] sm:$0xff]
        %v217 = vld [vmem:[#allocation2 + $0x68] sm:$0xf]
        %v218 = vld [vmem:[#allocation2 + $0x6c] sm:$0xff]
        %v219 = vld [vmem:[#allocation2 + $0x74] sm:$0xf]
        %v220 = vld [vmem:[#allocation2 + $0x78] sm:$0xff]
        %v221 = vld [vmem:[#allocation2 + $0x80] sm:$0xf]
        %v222 = vld [vmem:[#allocation2 + $0x84] sm:$0xff]
        %v223 = vld [vmem:[#allocation2 + $0x8c] sm:$0xf]
        %v224 = vld [vmem:[#allocation2 + $0x90] sm:$0xff]
        %v225 = vld [vmem:[#allocation2 + $0x98] sm:$0xf]
        %v226 = vld [vmem:[#allocation2 + $0x9c] sm:$0xff]
        %v227 = vld [vmem:[#allocation2 + $0xa4] sm:$0xf]
        %v228 = vld [vmem:[#allocation2 + $0xa8] sm:$0xff]
        %v229 = vld [vmem:[#allocation2 + $0xb0] sm:$0xf]
        %v230 = vld [vmem:[#allocation2 + $0xb4] sm:$0xff]
        %v231 = vld [vmem:[#allocation2 + $0xbc] sm:$0xf]
        %v232 = vld [vmem:[#allocation2 + $0xc0] sm:$0xff]
        %v233 = vld [vmem:[#allocation2 + $0xc8] sm:$0xf]
        %v234 = vld [vmem:[#allocation2 + $0xcc] sm:$0xff]
        %v235 = vld [vmem:[#allocation2 + $0xd4] sm:$0xf]
        %v236 = vld [vmem:[#allocation2 + $0xd8] sm:$0xff]
        %v237 = vld [vmem:[#allocation2 + $0xe0] sm:$0xf]
        %v238 = vld [vmem:[#allocation2 + $0xe4] sm:$0xff]
        %v239 = vld [vmem:[#allocation2 + $0xec] sm:$0xf]
        %v240 = vld [vmem:[#allocation2 + $0xf0] sm:$0xff]
        %v241 = vld [vmem:[#allocation2 + $0xf8] sm:$0xf]
        %v242 = vld [vmem:[#allocation2 + $0xfc] sm:$0xff]
        %v243 = vld [vmem:[#allocation2 + $0x104] sm:$0xf]
        %v244 = vld [vmem:[#allocation2 + $0x108] sm:$0xff]
        %v245 = vld [vmem:[#allocation2 + $0x110] sm:$0xf]
        %v246 = vld [vmem:[#allocation2 + $0x114] sm:$0xff]
        %v247 = vld [vmem:[#allocation2 + $0x11c] sm:$0xf]
        %v248 = vld [vmem:[#allocation2 + $0x120] sm:$0xff]
        %v249 = vld [vmem:[#allocation2 + $0x128] sm:$0xf]
        %v250 = vld [vmem:[#allocation2 + $0x12c] sm:$0xff]
        %v251 = vld [vmem:[#allocation2 + $0x134] sm:$0xf]
        %v252 = vld [vmem:[#allocation2 + $0x138] sm:$0xff]
        %v253 = vld [vmem:[#allocation2 + $0x140] sm:$0xf]
        %v254 = vld [vmem:[#allocation2 + $0x144] sm:$0xff]
        %v255 = vld [vmem:[#allocation2 + $0x14c] sm:$0xf]
        %v256 = vld [vmem:[#allocation2 + $0x150] sm:$0xff]
        %v257 = vld [vmem:[#allocation2 + $0x158] sm:$0xf]
        %v258 = vld [vmem:[#allocation2 + $0x15c] sm:$0xff]
        %v259 = vld [vmem:[#allocation2 + $0x164] sm:$0xf]
        %v260 = vld [vmem:[#allocation2 + $0x168] sm:$0xff]
        %v261 = vld [vmem:[#allocation2 + $0x170] sm:$0xf]
        %v262 = vld [vmem:[#allocation2 + $0x174] sm:$0xff]
        %v263 = vld [vmem:[#allocation2 + $0x17c] sm:$0xf]
        %v264 = vld [vmem:[#allocation2 + $0x180] sm:$0xff]
        %v265 = vld [vmem:[#allocation2 + $0x188] sm:$0xf]
        %v266 = vld [vmem:[#allocation2 + $0x18c] sm:$0xff]
        %v267 = vld [vmem:[#allocation2 + $0x194] sm:$0xf]
        %v268 = vld [vmem:[#allocation2 + $0x198] sm:$0xff]
        %v269 = vld [vmem:[#allocation2 + $0x1a0] sm:$0xf]
        %v270 = vld [vmem:[#allocation2 + $0x1a4] sm:$0xff]
        %v271 = vld [vmem:[#allocation2 + $0x1ac] sm:$0xf]
        %v272 = vld [vmem:[#allocation2 + $0x1b0] sm:$0xff]
        %v273 = vld [vmem:[#allocation2 + $0x1b8] sm:$0xf]
        %v274 = vld [vmem:[#allocation2 + $0x1bc] sm:$0xff]
        %v275 = vld [vmem:[#allocation2 + $0x1c4] sm:$0xf]
        %v276 = vld [vmem:[#allocation2 + $0x1c8] sm:$0xff]
        %v277 = vld [vmem:[#allocation2 + $0x1d0] sm:$0xf]
        %v278 = vld [vmem:[#allocation2 + $0x1d4] sm:$0xff]
        %v279 = vld [vmem:[#allocation2 + $0x1dc] sm:$0xf]
        %v280 = vld [vmem:[#allocation2 + $0x1e0] sm:$0xff]
        %v281 = vld [vmem:[#allocation2 + $0x1e8] sm:$0xf]
        %v282 = vld [vmem:[#allocation2 + $0x1ec] sm:$0xff]
        %v283 = vld [vmem:[#allocation2 + $0x1f4] sm:$0xf]
        %v284 = vld [vmem:[#allocation2 + $0x1f8] sm:$0xff]
        %v285 = vld [vmem:[#allocation2 + $0x200] sm:$0xf]
        %v286 = vld [vmem:[#allocation2 + $0x204] sm:$0xff]
        %v287 = vld [vmem:[#allocation2 + $0x20c] sm:$0xf]
        %v288 = vld [vmem:[#allocation2 + $0x210] sm:$0xff]
        %v289 = vld [vmem:[#allocation2 + $0x218] sm:$0xf]
        %v290 = vld [vmem:[#allocation2 + $0x21c] sm:$0xff]
        %v291 = vld [vmem:[#allocation2 + $0x224] sm:$0xf]
        %v292 = vld [vmem:[#allocation2 + $0x228] sm:$0xff]
        %v293 = vld [vmem:[#allocation2 + $0x230] sm:$0xf]
        %v294 = vld [vmem:[#allocation2 + $0x234] sm:$0xff]
        %v295 = vld [vmem:[#allocation2 + $0x23c] sm:$0xf]
        %v296 = vld [vmem:[#allocation2 + $0x240] sm:$0xff]
        %v297 = vld [vmem:[#allocation2 + $0x248] sm:$0xf]
        %v298 = vld [vmem:[#allocation2 + $0x24c] sm:$0xff]
        %v299 = vld [vmem:[#allocation2 + $0x254] sm:$0xf]
        %v300 = vld [vmem:[#allocation2 + $0x258] sm:$0xff]
        %v301 = vld [vmem:[#allocation2 + $0x260] sm:$0xf]
        %v302 = vld [vmem:[#allocation2 + $0x264] sm:$0xff]
        %v303 = vld [vmem:[#allocation2 + $0x26c] sm:$0xf]
        %v304 = vld [vmem:[#allocation2 + $0x270] sm:$0x33]
        %v305 = vld [vmem:[#allocation2 + $0x278] sm:$0x3]
        %v310 = vunpack.c.l.b16 %v196
        %v311 = vunpack.c.h.b16 %v196
        %v312 = vunpack.c.l.b16 %v197
        %v313 = vunpack.c.h.b16 %v197
        %v314 = vunpack.c.l.b16 %v198
        %v315 = vunpack.c.h.b16 %v198
        %v316 = vunpack.c.l.b16 %v199
        %v317 = vunpack.c.h.b16 %v199
        %v318 = vpack.c.b16 %v314, %v310
        %v319 = vpack.c.b16 %v315, %v311
        %v320 = vpack.c.b16 %v316, %v312
        %v321 = vpack.c.b16 %v317, %v313
        %v431 = vunpack.c.l.b16 %v200
        %v432 = vunpack.c.h.b16 %v200
        %v433 = vunpack.c.l.b16 %v201
        %v434 = vunpack.c.l.b16 %v202
        %v435 = vunpack.c.h.b16 %v202
        %v436 = vunpack.c.l.b16 %v203
        %v437 = vunpack.c.l.b16 %v204
        %v438 = vunpack.c.h.b16 %v204
        %v439 = vunpack.c.l.b16 %v205
        %v440 = vunpack.c.l.b16 %v206
        %v441 = vunpack.c.h.b16 %v206
        %v442 = vunpack.c.l.b16 %v207
        %v443 = vunpack.c.l.b16 %v208
        %v444 = vunpack.c.h.b16 %v208
        %v445 = vunpack.c.l.b16 %v209
        %v446 = vunpack.c.l.b16 %v210
        %v447 = vunpack.c.h.b16 %v210
        %v448 = vunpack.c.l.b16 %v211
        %v449 = vunpack.c.l.b16 %v212
        %v450 = vunpack.c.h.b16 %v212
        %v451 = vunpack.c.l.b16 %v213
        %v452 = vunpack.c.l.b16 %v214
        %v453 = vunpack.c.h.b16 %v214
        %v454 = vunpack.c.l.b16 %v215
        %v455 = vunpack.c.l.b16 %v216
        %v456 = vunpack.c.h.b16 %v216
        %v457 = vunpack.c.l.b16 %v217
        %v458 = vunpack.c.l.b16 %v218
        %v459 = vunpack.c.h.b16 %v218
        %v460 = vunpack.c.l.b16 %v219
        %v461 = vunpack.c.l.b16 %v220
        %v462 = vunpack.c.h.b16 %v220
        %v463 = vunpack.c.l.b16 %v221
        %v464 = vunpack.c.l.b16 %v222
        %v465 = vunpack.c.h.b16 %v222
        %v466 = vunpack.c.l.b16 %v223
        %v467 = vunpack.c.l.b16 %v224
        %v468 = vunpack.c.h.b16 %v224
        %v469 = vunpack.c.l.b16 %v225
        %v470 = vunpack.c.l.b16 %v226
        %v471 = vunpack.c.h.b16 %v226
        %v472 = vunpack.c.l.b16 %v227
        %v473 = vunpack.c.l.b16 %v228
        %v474 = vunpack.c.h.b16 %v228
        %v475 = vunpack.c.l.b16 %v229
        %v476 = vunpack.c.l.b16 %v230
        %v477 = vunpack.c.h.b16 %v230
        %v478 = vunpack.c.l.b16 %v231
        %v479 = vunpack.c.l.b16 %v232
        %v480 = vunpack.c.h.b16 %v232
        %v481 = vunpack.c.l.b16 %v233
        %v482 = vunpack.c.l.b16 %v234
        %v483 = vunpack.c.h.b16 %v234
        %v484 = vunpack.c.l.b16 %v235
        %v485 = vunpack.c.l.b16 %v236
        %v486 = vunpack.c.h.b16 %v236
        %v487 = vunpack.c.l.b16 %v237
        %v488 = vunpack.c.l.b16 %v238
        %v489 = vunpack.c.h.b16 %v238
        %v490 = vunpack.c.l.b16 %v239
        %v491 = vunpack.c.l.b16 %v240
        %v492 = vunpack.c.h.b16 %v240
        %v493 = vunpack.c.l.b16 %v241
        %v494 = vunpack.c.l.b16 %v242
        %v495 = vunpack.c.h.b16 %v242
        %v496 = vunpack.c.l.b16 %v243
        %v497 = vunpack.c.l.b16 %v244
        %v498 = vunpack.c.h.b16 %v244
        %v499 = vunpack.c.l.b16 %v245
        %v500 = vunpack.c.l.b16 %v246
        %v501 = vunpack.c.h.b16 %v246
        %v502 = vunpack.c.l.b16 %v247
        %v503 = vunpack.c.l.b16 %v248
        %v504 = vunpack.c.h.b16 %v248
        %v505 = vunpack.c.l.b16 %v249
        %v506 = vunpack.c.l.b16 %v250
        %v507 = vunpack.c.h.b16 %v250
        %v508 = vunpack.c.l.b16 %v251
        %v509 = vunpack.c.l.b16 %v252
        %v510 = vunpack.c.h.b16 %v252
        %v511 = vunpack.c.l.b16 %v253
        %v512 = vunpack.c.l.b16 %v254
        %v513 = vunpack.c.h.b16 %v254
        %v514 = vunpack.c.l.b16 %v255
        %v515 = vunpack.c.l.b16 %v256
        %v516 = vunpack.c.h.b16 %v256
        %v517 = vunpack.c.l.b16 %v257
        %v518 = vunpack.c.l.b16 %v258
        %v519 = vunpack.c.h.b16 %v258
        %v520 = vunpack.c.l.b16 %v259
        %v521 = vunpack.c.l.b16 %v260
        %v522 = vunpack.c.h.b16 %v260
        %v523 = vunpack.c.l.b16 %v261
        %v524 = vunpack.c.l.b16 %v262
        %v525 = vunpack.c.h.b16 %v262
        %v526 = vunpack.c.l.b16 %v263
        %v527 = vunpack.c.l.b16 %v264
        %v528 = vunpack.c.h.b16 %v264
        %v529 = vunpack.c.l.b16 %v265
        %v530 = vunpack.c.l.b16 %v266
        %v531 = vunpack.c.h.b16 %v266
        %v532 = vunpack.c.l.b16 %v267
        %v533 = vunpack.c.l.b16 %v268
        %v534 = vunpack.c.h.b16 %v268
        %v535 = vunpack.c.l.b16 %v269
        %v536 = vunpack.c.l.b16 %v270
        %v537 = vunpack.c.h.b16 %v270
        %v538 = vunpack.c.l.b16 %v271
        %v539 = vunpack.c.l.b16 %v272
        %v540 = vunpack.c.h.b16 %v272
        %v541 = vunpack.c.l.b16 %v273
        %v542 = vunpack.c.l.b16 %v274
        %v543 = vunpack.c.h.b16 %v274
        %v544 = vunpack.c.l.b16 %v275
        %v545 = vunpack.c.l.b16 %v276
        %v546 = vunpack.c.h.b16 %v276
        %v547 = vunpack.c.l.b16 %v277
        %v548 = vunpack.c.l.b16 %v278
        %v549 = vunpack.c.h.b16 %v278
        %v550 = vunpack.c.l.b16 %v279
        %v551 = vunpack.c.l.b16 %v280
        %v552 = vunpack.c.h.b16 %v280
        %v553 = vunpack.c.l.b16 %v281
        %v554 = vunpack.c.l.b16 %v282
        %v555 = vunpack.c.h.b16 %v282
        %v556 = vunpack.c.l.b16 %v283
        %v557 = vunpack.c.l.b16 %v284
        %v558 = vunpack.c.h.b16 %v284
        %v559 = vunpack.c.l.b16 %v285
        %v560 = vunpack.c.l.b16 %v286
        %v561 = vunpack.c.h.b16 %v286
        %v562 = vunpack.c.l.b16 %v287
        %v563 = vunpack.c.l.b16 %v288
        %v564 = vunpack.c.h.b16 %v288
        %v565 = vunpack.c.l.b16 %v289
        %v566 = vunpack.c.l.b16 %v290
        %v567 = vunpack.c.h.b16 %v290
        %v568 = vunpack.c.l.b16 %v291
        %v569 = vunpack.c.l.b16 %v292
        %v570 = vunpack.c.h.b16 %v292
        %v571 = vunpack.c.l.b16 %v293
        %v572 = vunpack.c.l.b16 %v294
        %v573 = vunpack.c.h.b16 %v294
        %v574 = vunpack.c.l.b16 %v295
        %v575 = vunpack.c.l.b16 %v296
        %v576 = vunpack.c.h.b16 %v296
        %v577 = vunpack.c.l.b16 %v297
        %v578 = vunpack.c.l.b16 %v298
        %v579 = vunpack.c.h.b16 %v298
        %v580 = vunpack.c.l.b16 %v299
        %v581 = vunpack.c.l.b16 %v300
        %v582 = vunpack.c.h.b16 %v300
        %v583 = vunpack.c.l.b16 %v301
        %v584 = vunpack.c.l.b16 %v302
        %v585 = vunpack.c.h.b16 %v302
        %v586 = vunpack.c.l.b16 %v303
        %v587 = vunpack.c.l.b16 %v304
        %v588 = vunpack.c.h.b16 %v304
        %v589 = vunpack.c.l.b16 %v305
        %v590 = vpack.c.b16 %v434, %v431
        %v591 = vpack.c.b16 %v435, %v432
        %v592 = vpack.c.b16 %v436, %v433
        %v593 = vpack.c.b16 %v440, %v437
        %v594 = vpack.c.b16 %v441, %v438
        %v595 = vpack.c.b16 %v442, %v439
        %v596 = vpack.c.b16 %v446, %v443
        %v597 = vpack.c.b16 %v447, %v444
        %v598 = vpack.c.b16 %v448, %v445
        %v599 = vpack.c.b16 %v452, %v449
        %v600 = vpack.c.b16 %v453, %v450
        %v601 = vpack.c.b16 %v454, %v451
        %v602 = vpack.c.b16 %v458, %v455
        %v603 = vpack.c.b16 %v459, %v456
        %v604 = vpack.c.b16 %v460, %v457
        %v605 = vpack.c.b16 %v464, %v461
        %v606 = vpack.c.b16 %v465, %v462
        %v607 = vpack.c.b16 %v466, %v463
        %v608 = vpack.c.b16 %v470, %v467
        %v609 = vpack.c.b16 %v471, %v468
        %v610 = vpack.c.b16 %v472, %v469
        %v611 = vpack.c.b16 %v476, %v473
        %v612 = vpack.c.b16 %v477, %v474
        %v613 = vpack.c.b16 %v478, %v475
        %v614 = vpack.c.b16 %v482, %v479
        %v615 = vpack.c.b16 %v483, %v480
        %v616 = vpack.c.b16 %v484, %v481
        %v617 = vpack.c.b16 %v488, %v485
        %v618 = vpack.c.b16 %v489, %v486
        %v619 = vpack.c.b16 %v490, %v487
        %v620 = vpack.c.b16 %v494, %v491
        %v621 = vpack.c.b16 %v495, %v492
        %v622 = vpack.c.b16 %v496, %v493
        %v623 = vpack.c.b16 %v500, %v497
        %v624 = vpack.c.b16 %v501, %v498
        %v625 = vpack.c.b16 %v502, %v499
        %v626 = vpack.c.b16 %v506, %v503
        %v627 = vpack.c.b16 %v507, %v504
        %v628 = vpack.c.b16 %v508, %v505
        %v629 = vpack.c.b16 %v512, %v509
        %v630 = vpack.c.b16 %v513, %v510
        %v631 = vpack.c.b16 %v514, %v511
        %v632 = vpack.c.b16 %v518, %v515
        %v633 = vpack.c.b16 %v519, %v516
        %v634 = vpack.c.b16 %v520, %v517
        %v635 = vpack.c.b16 %v524, %v521
        %v636 = vpack.c.b16 %v525, %v522
        %v637 = vpack.c.b16 %v526, %v523
        %v638 = vpack.c.b16 %v530, %v527
        %v639 = vpack.c.b16 %v531, %v528
        %v640 = vpack.c.b16 %v532, %v529
        %v641 = vpack.c.b16 %v536, %v533
        %v642 = vpack.c.b16 %v537, %v534
        %v643 = vpack.c.b16 %v538, %v535
        %v644 = vpack.c.b16 %v542, %v539
        %v645 = vpack.c.b16 %v543, %v540
        %v646 = vpack.c.b16 %v544, %v541
        %v647 = vpack.c.b16 %v548, %v545
        %v648 = vpack.c.b16 %v549, %v546
        %v649 = vpack.c.b16 %v550, %v547
        %v650 = vpack.c.b16 %v554, %v551
        %v651 = vpack.c.b16 %v555, %v552
        %v652 = vpack.c.b16 %v556, %v553
        %v653 = vpack.c.b16 %v560, %v557
        %v654 = vpack.c.b16 %v561, %v558
        %v655 = vpack.c.b16 %v562, %v559
        %v656 = vpack.c.b16 %v566, %v563
        %v657 = vpack.c.b16 %v567, %v564
        %v658 = vpack.c.b16 %v568, %v565
        %v659 = vpack.c.b16 %v572, %v569
        %v660 = vpack.c.b16 %v573, %v570
        %v661 = vpack.c.b16 %v574, %v571
        %v662 = vpack.c.b16 %v578, %v575
        %v663 = vpack.c.b16 %v579, %v576
        %v664 = vpack.c.b16 %v580, %v577
        %v665 = vpack.c.b16 %v584, %v581
        %v666 = vpack.c.b16 %v585, %v582
        %v667 = vpack.c.b16 %v586, %v583
        %v668 = vpack.c.b16 %v587, %v587
        %v669 = vpack.c.b16 %v588, %v588
        %v670 = vpack.c.b16 %v589, %v589
        %vm749 = vcmask 293888
        %v751 = vsel %vm749, %v321, 0
        %vm753 = vcmask 1041408
        %v755 = vsel %vm753, %v668, 0
        %v758 = vsel %vm753, %v669, 0
        %v761 = vsel %vm753, %v670, 0
        %763 = vmatprep.subr.bf16.mxu0 %v591
        %764 = vmatpush1.bf16.msra.mxu0 %v590
        %765 = vmatprep.subr.bf16.mxu0 %v594
        %766 = vmatpush1.bf16.msra.mxu0 %v593
        %767 = vmatprep.subr.bf16.mxu0 %v597
        %768 = vmatpush1.bf16.msra.mxu0 %v596
        %769 = vmatprep.subr.bf16.mxu0 %v600
        %770 = vmatpush1.bf16.msra.mxu0 %v599
        %771 = vmatprep.subr.bf16.mxu0 %v603
        %772 = vmatpush1.bf16.msra.mxu0 %v602
        %773 = vmatprep.subr.bf16.mxu0 %v606
        %774 = vmatpush1.bf16.msra.mxu0 %v605
        %775 = vmatprep.subr.bf16.mxu0 %v609
        %776 = vmatpush1.bf16.msra.mxu0 %v608
        %777 = vmatprep.subr.bf16.mxu0 %v612
        %778 = vmatpush1.bf16.msra.mxu0 %v611
        %779 = vmatprep.subr.bf16.mxu0 %v615
        %780 = vmatpush1.bf16.msra.mxu0 %v614
        %781 = vmatprep.subr.bf16.mxu0 %v618
        %782 = vmatpush1.bf16.msra.mxu0 %v617
        %783 = vmatprep.subr.bf16.mxu0 %v621
        %784 = vmatpush1.bf16.msra.mxu0 %v620
        %785 = vmatprep.subr.bf16.mxu0 %v624
        %786 = vmatpush1.bf16.msra.mxu0 %v623
        %787 = vmatprep.subr.bf16.mxu0 %v627
        %788 = vmatpush1.bf16.msra.mxu0 %v626
        %789 = vmatprep.subr.bf16.mxu0 %v630
        %790 = vmatpush1.bf16.msra.mxu0 %v629
        %791 = vmatprep.subr.bf16.mxu0 %v633
        %792 = vmatpush1.bf16.msra.mxu0 %v632
        %793 = vmatprep.subr.bf16.mxu0 %v636
        %794 = vmatpush1.bf16.msra.mxu0 %v635
        %795 = vmatprep.mubr.bf16.mxu0 %v319
        %796 = vmatmul.mubr.bf16.gmra.mrb[0].mxu0 %v318
        %v797 = vpop.f32.mrb[0].mxu0
        %v798 = vadd.f32 0.0, %v797
        %v799 = vpop.f32.mrb[0].mxu0
        %v800 = vadd.f32 0.0, %v799
        %v801 = vpop.f32.mrb[0].mxu0
        %v802 = vadd.f32 0.0, %v801
        %v803 = vpop.f32.mrb[0].mxu0
        %v804 = vadd.f32 0.0, %v803
        %805 = vdwg.mxu0
        %806 = vmatprep.subr.bf16.mxu0 %v639
        %807 = vmatpush1.bf16.msra.mxu0 %v638
        %808 = vmatprep.subr.bf16.mxu0 %v642
        %809 = vmatpush1.bf16.msra.mxu0 %v641
        %810 = vmatprep.subr.bf16.mxu0 %v645
        %811 = vmatpush1.bf16.msra.mxu0 %v644
        %812 = vmatprep.subr.bf16.mxu0 %v648
        %813 = vmatpush1.bf16.msra.mxu0 %v647
        %814 = vmatprep.subr.bf16.mxu0 %v651
        %815 = vmatpush1.bf16.msra.mxu0 %v650
        %816 = vmatprep.subr.bf16.mxu0 %v654
        %817 = vmatpush1.bf16.msra.mxu0 %v653
        %818 = vmatprep.subr.bf16.mxu0 %v657
        %819 = vmatpush1.bf16.msra.mxu0 %v656
        %820 = vmatprep.subr.bf16.mxu0 %v660
        %821 = vmatpush1.bf16.msra.mxu0 %v659
        %822 = vmatprep.subr.bf16.mxu0 %v663
        %823 = vmatpush1.bf16.msra.mxu0 %v662
        %824 = vmatprep.subr.bf16.mxu0 %v666
        %825 = vmatpush1.bf16.msra.mxu0 %v665
        %826 = vmatprep.subr.bf16.mxu0 %v758
        %827 = vmatpush1.bf16.msra.mxu0 %v755
        %828 = vmatprep.subr.bf16.mxu0 0
        %829 = vmatpush1.bf16.msra.mxu0 0
        %830 = vmatprep.subr.bf16.mxu0 0
        %831 = vmatpush1.bf16.msra.mxu0 0
        %832 = vmatprep.subr.bf16.mxu0 0
        %833 = vmatpush1.bf16.msra.mxu0 0
        %834 = vmatprep.subr.bf16.mxu0 0
        %835 = vmatpush1.bf16.msra.mxu0 0
        %836 = vmatprep.subr.bf16.mxu0 0
        %837 = vmatpush1.bf16.msra.mxu0 0
        %838 = vmatprep.mubr.bf16.mxu0 %v751
        %839 = vmatmul.mubr.bf16.gmra.mrb[0].mxu0 %v320
        %v840 = vpop.f32.mrb[0].mxu0
        %v841 = vadd.f32 %v798, %v840
        %v842 = vpop.f32.mrb[0].mxu0
        %v843 = vadd.f32 %v800, %v842
        %v844 = vpop.f32.mrb[0].mxu0
        %v845 = vadd.f32 %v802, %v844
        %v846 = vpop.f32.mrb[0].mxu0
        %v847 = vadd.f32 %v804, %v846
        %848 = vdwg.mxu0
        %849 = vmatprep.subr.bf16.mxu0 0
        %850 = vmatpush1.bf16.msra.mxu0 %v592
        %851 = vmatprep.subr.bf16.mxu0 0
        %852 = vmatpush1.bf16.msra.mxu0 %v595
        %853 = vmatprep.subr.bf16.mxu0 0
        %854 = vmatpush1.bf16.msra.mxu0 %v598
        %855 = vmatprep.subr.bf16.mxu0 0
        %856 = vmatpush1.bf16.msra.mxu0 %v601
        %857 = vmatprep.subr.bf16.mxu0 0
        %858 = vmatpush1.bf16.msra.mxu0 %v604
        %859 = vmatprep.subr.bf16.mxu0 0
        %860 = vmatpush1.bf16.msra.mxu0 %v607
        %861 = vmatprep.subr.bf16.mxu0 0
        %862 = vmatpush1.bf16.msra.mxu0 %v610
        %863 = vmatprep.subr.bf16.mxu0 0
        %864 = vmatpush1.bf16.msra.mxu0 %v613
        %865 = vmatprep.subr.bf16.mxu0 0
        %866 = vmatpush1.bf16.msra.mxu0 %v616
        %867 = vmatprep.subr.bf16.mxu0 0
        %868 = vmatpush1.bf16.msra.mxu0 %v619
        %869 = vmatprep.subr.bf16.mxu0 0
        %870 = vmatpush1.bf16.msra.mxu0 %v622
        %871 = vmatprep.subr.bf16.mxu0 0
        %872 = vmatpush1.bf16.msra.mxu0 %v625
        %873 = vmatprep.subr.bf16.mxu0 0
        %874 = vmatpush1.bf16.msra.mxu0 %v628
        %875 = vmatprep.subr.bf16.mxu0 0
        %876 = vmatpush1.bf16.msra.mxu0 %v631
        %877 = vmatprep.subr.bf16.mxu0 0
        %878 = vmatpush1.bf16.msra.mxu0 %v634
        %879 = vmatprep.subr.bf16.mxu0 0
        %880 = vmatpush1.bf16.msra.mxu0 %v637
        %881 = vmatprep.mubr.bf16.mxu0 %v319
        %882 = vmatmul.mubr.bf16.gmra.mrb[0].mxu0 %v318
        %v883 = vpop.f32.mrb[0].mxu0
        %v884 = vadd.f32 0.0, %v883
        %v885 = vpop.f32.mrb[0].mxu0
        %v886 = vpop.f32.mrb[0].mxu0
        %v887 = vadd.f32 0.0, %v886
        %v888 = vpop.f32.mrb[0].mxu0
        %889 = vdwg.mxu0
        %890 = vmatprep.subr.bf16.mxu0 0
        %891 = vmatpush1.bf16.msra.mxu0 %v640
        %892 = vmatprep.subr.bf16.mxu0 0
        %893 = vmatpush1.bf16.msra.mxu0 %v643
        %894 = vmatprep.subr.bf16.mxu0 0
        %895 = vmatpush1.bf16.msra.mxu0 %v646
        %896 = vmatprep.subr.bf16.mxu0 0
        %897 = vmatpush1.bf16.msra.mxu0 %v649
        %898 = vmatprep.subr.bf16.mxu0 0
        %899 = vmatpush1.bf16.msra.mxu0 %v652
        %900 = vmatprep.subr.bf16.mxu0 0
        %901 = vmatpush1.bf16.msra.mxu0 %v655
        %902 = vmatprep.subr.bf16.mxu0 0
        %903 = vmatpush1.bf16.msra.mxu0 %v658
        %904 = vmatprep.subr.bf16.mxu0 0
        %905 = vmatpush1.bf16.msra.mxu0 %v661
        %906 = vmatprep.subr.bf16.mxu0 0
        %907 = vmatpush1.bf16.msra.mxu0 %v664
        %908 = vmatprep.subr.bf16.mxu0 0
        %909 = vmatpush1.bf16.msra.mxu0 %v667
        %910 = vmatprep.subr.bf16.mxu0 0
        %911 = vmatpush1.bf16.msra.mxu0 %v761
        %912 = vmatprep.subr.bf16.mxu0 0
        %913 = vmatpush1.bf16.msra.mxu0 0
        %914 = vmatprep.subr.bf16.mxu0 0
        %915 = vmatpush1.bf16.msra.mxu0 0
        %916 = vmatprep.subr.bf16.mxu0 0
        %917 = vmatpush1.bf16.msra.mxu0 0
        %918 = vmatprep.subr.bf16.mxu0 0
        %919 = vmatpush1.bf16.msra.mxu0 0
        %920 = vmatprep.subr.bf16.mxu0 0
        %921 = vmatpush1.bf16.msra.mxu0 0
        %922 = vmatprep.mubr.bf16.mxu0 %v751
        %923 = vmatmul.mubr.bf16.gmra.mrb[0].mxu0 %v320
        %v924 = vpop.f32.mrb[0].mxu0
        %v925 = vadd.f32 %v884, %v924
        %v926 = vpop.f32.mrb[0].mxu0
        %v927 = vpop.f32.mrb[0].mxu0
        %v928 = vadd.f32 %v887, %v927
        %v929 = vpop.f32.mrb[0].mxu0
        %930 = vdwg.mxu0
        %v931 = vmul.f32 %v841, 0.5
        %v932 = vmul.f32 %v843, 0.5
        %v933 = vmul.f32 %v925, 0.5
        %v934 = vmul.f32 %v845, 0.5
        %v935 = vmul.f32 %v847, 0.5
        %v936 = vmul.f32 %v928, 0.5
        %v937 = vmul.f32 %v841, 0.70710677
        %v938 = vmul.f32 %v843, 0.70710677
        %v939 = vmul.f32 %v925, 0.70710677
        %v940 = vmul.f32 %v845, 0.70710677
        %v941 = vmul.f32 %v847, 0.70710677
        %v942 = vmul.f32 %v928, 0.70710677
        %v943 = verf.f32.pop %v937
        %v944 = verf.f32.pop %v938
        %v945 = verf.f32.pop %v939
        %v946 = verf.f32.pop %v940
        %v947 = verf.f32.pop %v941
        %v948 = verf.f32.pop %v942
        %v949 = vadd.f32 %v943, 1.0
        %v950 = vadd.f32 %v944, 1.0
        %v951 = vadd.f32 %v945, 1.0
        %v952 = vadd.f32 %v946, 1.0
        %v953 = vadd.f32 %v947, 1.0
        %v954 = vadd.f32 %v948, 1.0
        %v955 = vmul.f32 %v931, %v949
        %v956 = vmul.f32 %v932, %v950
        %v957 = vmul.f32 %v933, %v951
        %v958 = vmul.f32 %v934, %v952
        %v959 = vmul.f32 %v935, %v953
        %v960 = vmul.f32 %v936, %v954
        %961 = vst [vmem:[%s179] sm:$0xff] %v955
        %962 = vst [vmem:[%s179 + $0x8] sm:$0xff] %v956
        %963 = vst [vmem:[%s179 + $0x10] sm:$0xff] %v957
        %964 = vst [vmem:[%s179 + $0x18] sm:$0xff] %v958
        %965 = vst [vmem:[%s179 + $0x20] sm:$0xff] %v959
        %966 = vst [vmem:[%s179 + $0x28] sm:$0xff] %v960
        %v967 = vmax.f32 %v955, %v958
        %v968 = vrot.slane %v967, 4
        %v969 = vmax.f32 %v967, %v968
        %v970 = vrot.slane %v969, 2
        %v971 = vmax.f32 %v969, %v970
        %v972 = vrot.slane %v971, 1
        %v973 = vmax.f32 %v971, %v972
        %v974 = vmax.f32 %v956, %v959
        %v975 = vrot.slane %v974, 4
        %v976 = vmax.f32 %v974, %v975
        %v977 = vrot.slane %v976, 2
        %v978 = vmax.f32 %v976, %v977
        %v979 = vrot.slane %v978, 1
        %v980 = vmax.f32 %v978, %v979
        %v981 = vmax.f32 %v957, %v960
        %v982 = vrot.slane %v981, 4
        %v983 = vmax.f32 %v981, %v982
        %v984 = vrot.slane %v983, 2
        %v985 = vmax.f32 %v983, %v984
        %v986 = vrot.slane %v985, 1
        %v987 = vmax.f32 %v985, %v986
        %v991 = vcombine.low %v973, %v980
        %v993 = vunpack.c.l.s4 1966171168
        %v994 = vunpack.c.0.s8 %v993
        %v995 = vlaneseq
        %v996 = vshrl.u32 %v995, 7
        %v997 = vsub.s32 %v994, %v996
        %v998 = vrot.slane %v991, %v997
        %v1000 = vunpack.c.l.s4 1966171168
        %v1001 = vunpack.c.0.s8 %v1000
        %v1002 = vlaneseq
        %v1003 = vshrl.u32 %v1002, 7
        %v1004 = vsub.s32 %v1001, %v1003
        %v1005 = vrot.slane %v987, %v1004
        %v1006 = vcombine.low %v998, %v1005
        %v1008 = vunpack.c.l.s4 1966171168
        %v1009 = vunpack.c.0.s8 %v1008
        %v1010 = vlaneseq
        %v1011 = vshrl.u32 %v1010, 7
        %v1012 = vsub.s32 %v1009, %v1011
        %v1013 = vrot.slane %v1006, %v1012
        %v1015 = vlaneseq
        %vm1016 = vcmp.ge.s32.totalorder %v1015, 0
        %vm1017 = vcmp.lt.s32.totalorder %v1015, 384
        %vm1018 = vmand %vm1016, %vm1017
        %1019 = vst.msk [vmem:[%s194] sm:$0x7] %vm1018, %v1013
        %s1020 = sand.u32 %s74, 1
        %s1021 = scalar_lea.sflag [#allocation4], %s1020
        %s1022 = sand.u32 %s74, 1
        %s1023 = smul.addr %s1022, 48
        %s1024 = scalar_lea.vmem [#allocation5], %s1023
        %p1025 = scmp.lt.s32.totalorder %s19, 1
        %s1026 = scalar_select %p1025, %s19, 1
        %s1027 = smul.addr %s1026, 3
        %s1028 = scalar_lea.vmem %s3, %s1027
        // Predicated region
        $region33: #{cnn_forward.1} parent=27 // pred_check
          %p1029 = pneg %p84
        $region34: #{cnn_forward.1} parent=27 // pred_check_branch
          %1031 = sbr.rel (%p1029) target = $region36
        $region35: #{cnn_forward.1} parent=27 // pred_region
          %s1033 = ssub.s32 768, 768
          %1034 = vsyncadd %s1021, %s1033
          %s1035 = smul.addr %s19, 6
          %s1036 = smul.addr %s1035, 128
          %s1037 = scalar_lea.hbm %s2, %s1036
          %s1038 = sshll.u32 %s1024, 4
          %s1039 = int_to_ptr.vmem [resolvable:$true] %s1038
          %1044 = dma.vmem_to_hbm [thread:$0]  %s1039, 768, %s1037, %s1021, 384, 384, 24
        $region36: #{cnn_forward.1} parent=27 // pred_fallthru
          _
        // Predicated region
        $region37: #{cnn_forward.1} parent=27 // pred_check
          %p1045 = pneg %p110
        $region38: #{cnn_forward.1} parent=27 // pred_check_branch
          %1047 = sbr.rel (%p1045) target = $region40
        $region39: #{cnn_forward.1} parent=27 // pred_region
          _
        $region40: #{cnn_forward.1} parent=27 // pred_fallthru
          _
      $region28: #{cnn_forward.1} parent=5 // pred_fallthru
        _
      %p1048 = scmp.le.s32.totalorder 2, %s14
      // Predicated region
      $region41: #{cnn_forward.1} parent=5 // pred_check
        %p1049 = pneg %p1048
      $region42: #{cnn_forward.1} parent=5 // pred_check_branch
        %1051 = sbr.rel (%p1049) target = $region44
      $region43: #{cnn_forward.1} parent=5 // pred_region
        %s1052 = ssub.s32 %s14, 2
        // Predicated region
        $region45: #{cnn_forward.1} parent=43 // pred_check
          %p1053 = pneg %p90
        $region46: #{cnn_forward.1} parent=43 // pred_check_branch
          %1055 = sbr.rel (%p1053) target = $region48
        $region47: #{cnn_forward.1} parent=43 // pred_region
          %s1056 = sand.u32 %s75, 1
          %s1057 = scalar_lea.sflag [#allocation4], %s1056
          %s1058 = sand.u32 %s75, 1
          %s1059 = smul.addr %s1058, 48
          %s1060 = scalar_lea.vmem [#allocation5], %s1059
          %1061 = dma.done %s1057, 768
        $region48: #{cnn_forward.1} parent=43 // pred_fallthru
          _
        // Predicated region
        $region49: #{cnn_forward.1} parent=43 // pred_check
          %p1062 = pneg %p116
        $region50: #{cnn_forward.1} parent=43 // pred_check_branch
          %1064 = sbr.rel (%p1062) target = $region52
        $region51: #{cnn_forward.1} parent=43 // pred_region
          %p1065 = scmp.lt.s32.totalorder %s20, 1
          %s1066 = scalar_select %p1065, %s20, 1
          %s1067 = smul.addr %s1066, 3
          %s1068 = scalar_lea.vmem %s3, %s1067
        $region52: #{cnn_forward.1} parent=43 // pred_fallthru
          _
      $region44: #{cnn_forward.1} parent=5 // pred_fallthru
        _
    $region6: #{cnn_forward.1} parent=1 // loop_footer
      %s18 = sadd.s32 1, %s14
    $region7: #{cnn_forward.1} parent=1 // loop_footer_branch
      %13 = sbr.rel target = $region3
    $region8: #{cnn_forward.1} parent=1 // loop_exit
      _
    %1069 = vsyncpa [#allocation3], 1
    %s1070 = scalar_lea.sflag [#allocation3], 1
    %1071 = vsyncpa %s1070, 1
    %1072 = vsyncpa [#allocation4], 1
    %s1073 = scalar_lea.sflag [#allocation4], 1
    %1074 = vsyncpa %s1073, 1

</llo_original>
